<compile_context>
chip_gen: v7x
topology: tpu7x:2x2x1
jax: 0.10.0
libtpu: 0.0.40
codegen_flags: <defaults>
</compile_context>

<pallas_src>
import jax
import jax.numpy as jnp
from jax import lax
from jax.experimental import pallas as pl
from jax.experimental.pallas import tpu as pltpu


def _round_up(x, m):
    return (x + m - 1) // m * m


def _vmem_capacity_bytes():
    try:
        return int(pltpu.get_tpu_info().vmem_capacity_bytes)
    except Exception:
        return 64 * 1024 * 1024  # conservative fallback: v7x physical VMEM


def _default_num_splits():
    # 2 TensorCores per chip on v7x; v5e/v6e have a single TC.
    try:
        kind = jax.devices()[0].device_kind.lower()
        return 2 if ("v7" in kind or "tpu7" in kind) else 1
    except Exception:
        return 2


def _wce_kernel(logits_ref, targets_ref, wrow_ref, num_ref, m_sc, s_sc, xt_sc):
    c = pl.program_id(2)                 # class-reduction (innermost, "arbitrary") axis
    tile_c = logits_ref.shape[-1]

    @pl.when(c == 0)
    def _():
        m_sc[...] = jnp.full_like(m_sc, -jnp.inf)
        s_sc[...] = jnp.zeros_like(s_sc)
        xt_sc[...] = jnp.zeros_like(xt_sc)

    x = logits_ref[...].astype(jnp.float32)     # (TB, TC)
    tgt = targets_ref[...]                      # (TB, 1) int32

    # global class index of each lane; one-hot select of the target logit
    col = c * tile_c + lax.broadcasted_iota(jnp.int32, x.shape, 1)
    onehot = col == tgt                         # padded rows (tgt = -1) never match

    # online (streaming) logsumexp over class blocks
    m_prev = m_sc[...]
    m_new = jnp.maximum(m_prev, jnp.max(x, axis=-1, keepdims=True))
    s_sc[...] = s_sc[...] * jnp.exp(m_prev - m_new) + jnp.sum(
        jnp.exp(x - m_new), axis=-1, keepdims=True)
    xt_sc[...] += jnp.sum(jnp.where(onehot, x, 0.0), axis=-1, keepdims=True)
    m_sc[...] = m_new

    @pl.when(c == pl.num_programs(2) - 1)
    def _():
        lse = m_sc[...] + jnp.log(s_sc[...])
        # per-row weighted NLL; weight gather & denominator live in the wrapper
        num_ref[...] = wrow_ref[...] * (lse - xt_sc[...])


def weighted_cross_entropy_loss(y_pred, y_true, weight=None, *,
                                tile_b=512, tile_c=2048, num_splits=None):
    """y_pred: (N, C) logits, y_true: (N,) int class indices, weight: (C,) or None."""
    N, C = y_pred.shape
    if weight is None:
        weight = jnp.ones((C,), jnp.float32)
    weight = weight.astype(jnp.float32)

    if num_splits is None:
        num_splits = _default_num_splits()

    # --- wrapper-side weight gather + denominator (plain XLA, one tiny pass) ---
    tgt = y_true.astype(jnp.int32)
    w_row = weight[tgt]                        # (N,) f32, gathered BEFORE any -1 padding
    den = jnp.sum(w_row)

    # --- generation-aware VMEM budget ---
    vmem_cap = _vmem_capacity_bytes()
    vmem_limit = min(vmem_cap * 3 // 4, 96 * 1024 * 1024)   # 96 MiB (v5e/v6e), 48 MiB (v7x)
    budget = vmem_limit // 2                                 # logits-stream budget

    itemsize = jnp.dtype(y_pred.dtype).itemsize

    # --- class-axis tiling (lane aligned) ---
    c_pad = _round_up(C, 128)
    tile_c = max(128, min(tile_c, c_pad) // 128 * 128)
    c_pad = _round_up(c_pad, tile_c)
    c_blocks = c_pad // tile_c

    # --- batch tiling: 2 double-buffered native-dtype DMA blocks + ~5 live f32 temps ---
    per_row = tile_c * (2 * itemsize + 5 * 4)
    max_tile_b = max(8, (budget // per_row) // 8 * 8)
    tile_b = max(8, min(tile_b, max_tile_b, _round_up(N, 8)) // 8 * 8)

    blocks = pl.cdiv(N, tile_b)
    if blocks < num_splits:
        num_splits = 1
    bps = pl.cdiv(blocks, num_splits)           # batch blocks per split
    n_pad = num_splits * bps * tile_b

    # --- neutral padding: class-pad with a large negative logit (exp underflows to 0),
    #     batch-pad rows get weight 0 / target -1 (contribute exactly 0) ---
    if c_pad != C:
        y_pred = jnp.pad(y_pred, ((0, 0), (0, c_pad - C)), constant_values=-1e30)
    if n_pad != N:
        y_pred = jnp.pad(y_pred, ((0, n_pad - N), (0, 0)))
        tgt = jnp.pad(tgt, (0, n_pad - N), constant_values=-1)
        w_row = jnp.pad(w_row, (0, n_pad - N))
    targets_2d = tgt.reshape(n_pad, 1)
    w_row_2d = w_row.reshape(n_pad, 1)

    num_part = pl.pallas_call(
        _wce_kernel,
        out_shape=jax.ShapeDtypeStruct((n_pad, 1), jnp.float32),
        grid_spec=pltpu.PrefetchScalarGridSpec(
            num_scalar_prefetch=0,
            grid=(num_splits, bps, c_blocks),
            in_specs=[
                pl.BlockSpec((tile_b, tile_c), lambda s, b, c: (s * bps + b, c)),
                pl.BlockSpec((tile_b, 1), lambda s, b, c: (s * bps + b, 0)),
                pl.BlockSpec((tile_b, 1), lambda s, b, c: (s * bps + b, 0)),
            ],
            out_specs=pl.BlockSpec((tile_b, 1), lambda s, b, c: (s * bps + b, 0)),
            scratch_shapes=[pltpu.VMEM((tile_b, 1), jnp.float32)] * 3,
        ),
        compiler_params=pltpu.CompilerParams(
            dimension_semantics=("parallel", "arbitrary", "arbitrary"),
            vmem_limit_bytes=int(vmem_limit),
        ),
    )(y_pred, targets_2d, w_row_2d)

    # TODO(synk): add a custom_vjp ((softmax(x) - onehot(t)) * w[t] / den, one more
    # streaming pass over logits) so this loss is usable under jax.grad.
    # TODO(synk): for tiny C (<~64) lane utilization is C/128; a plain-XLA fallback
    # would be faster there.
    return num_part.sum() / den


def _reference(y_pred, y_true, weight):
    logp = jax.nn.log_softmax(y_pred.astype(jnp.float32), axis=-1)
    picked = jnp.take_along_axis(logp, y_true[:, None], axis=-1)[:, 0]
    w = weight[y_true]
    return -jnp.sum(w * picked) / jnp.sum(w)


if __name__ == "__main__":
    key = jax.random.PRNGKey(0)
    k1, k2, k3, k4 = jax.random.split(key, 4)

    # Case 1: small shapes (single batch block, single class block)
    N, C = 32, 8
    y_pred = jax.random.normal(k1, (N, C), dtype=jnp.float32)
    y_true = jax.random.randint(k2, (N,), 0, C, dtype=jnp.int32)
    weight = jnp.linspace(0.5, 2.0, C, dtype=jnp.float32)  # CrossEntropyLoss(weight=...)
    loss = jax.block_until_ready(weighted_cross_entropy_loss(y_pred, y_true, weight))
    ref = _reference(y_pred, y_true, weight)
    assert jnp.allclose(loss, ref, rtol=1e-5, atol=1e-5), (loss, ref)

    # Case 2: exercises class-axis online-logsumexp tiling (3 class blocks),
    # class padding (300 -> 384), batch padding (20 -> 32) and bf16 ingestion.
    N2, C2 = 20, 300
    y_pred2 = jax.random.normal(k3, (N2, C2), dtype=jnp.bfloat16)
    y_true2 = jax.random.randint(k4, (N2,), 0, C2, dtype=jnp.int32)
    weight2 = jnp.linspace(0.25, 1.75, C2, dtype=jnp.float32)
    loss2 = jax.block_until_ready(
        weighted_cross_entropy_loss(y_pred2, y_true2, weight2, tile_b=16, tile_c=128))
    ref2 = _reference(y_pred2, y_true2, weight2)
    assert jnp.allclose(loss2, ref2, rtol=1e-3, atol=1e-3), (loss2, ref2)

    print("KERNEL_OK")
</pallas_src>

<mosaic_0001>
module attributes {stable_mosaic.version = 11 : i64} {
  func.func @_wce_kernel(%arg0: i32, %arg1: i32, %arg2: i32, %arg3: memref<32x128xf32, #tpu.memory_space<vmem>>, %arg4: memref<32x1xi32, #tpu.memory_space<vmem>>, %arg5: memref<32x1xf32, #tpu.memory_space<vmem>>, %arg6: memref<32x1xf32, #tpu.memory_space<vmem>>, %arg7: memref<32x1xf32, #tpu.memory_space<vmem>>, %arg8: memref<32x1xf32, #tpu.memory_space<vmem>>, %arg9: memref<32x1xf32, #tpu.memory_space<vmem>>) attributes {dimension_semantics = [#tpu.dimension_semantics<parallel>, #tpu.dimension_semantics<arbitrary>, #tpu.dimension_semantics<arbitrary>], iteration_bounds = array<i64: 1, 1, 1>, scalar_prefetch = 0 : i64, scratch_operands = 3 : i64, tpu.core_type = #tpu.core_type<tc>, window_params = [{transform_indices = @transform_0, window_bounds = array<i64: 32, 128>}, {transform_indices = @transform_1, window_bounds = array<i64: 32, 1>}, {transform_indices = @transform_2, window_bounds = array<i64: 32, 1>}, {transform_indices = @transform_3, window_bounds = array<i64: 32, 1>}]} {
    %c0_i32 = arith.constant 0 : i32
    %0 = arith.cmpi eq, %arg2, %c0_i32 : i32
    %1 = arith.extui %0 : i1 to i32
    %c0_i32_0 = arith.constant 0 : i32
    %2 = arith.cmpi ne, %1, %c0_i32_0 : i32
    scf.if %2 {
      %cst_21 = arith.constant 0xFF800000 : f32
      %37 = vector.broadcast %cst_21 : f32 to vector<32x1xf32>
      %c0_22 = arith.constant 0 : index
      %c0_23 = arith.constant 0 : index
      %38 = vector.load %arg7[%c0_22, %c0_23] : memref<32x1xf32, #tpu.memory_space<vmem>>, vector<32x1xf32>
      tpu.vector_store %arg7[%c0_22, %c0_23], %37 {strides = array<i32>} : memref<32x1xf32, #tpu.memory_space<vmem>>, vector<32x1xf32>,
      %cst_24 = arith.constant 0.000000e+00 : f32
      %39 = vector.broadcast %cst_24 : f32 to vector<32x1xf32>
      %c0_25 = arith.constant 0 : index
      %c0_26 = arith.constant 0 : index
      %40 = vector.load %arg8[%c0_25, %c0_26] : memref<32x1xf32, #tpu.memory_space<vmem>>, vector<32x1xf32>
      tpu.vector_store %arg8[%c0_25, %c0_26], %39 {strides = array<i32>} : memref<32x1xf32, #tpu.memory_space<vmem>>, vector<32x1xf32>,
      %cst_27 = arith.constant 0.000000e+00 : f32
      %41 = vector.broadcast %cst_27 : f32 to vector<32x1xf32>
      %c0_28 = arith.constant 0 : index
      %c0_29 = arith.constant 0 : index
      %42 = vector.load %arg9[%c0_28, %c0_29] : memref<32x1xf32, #tpu.memory_space<vmem>>, vector<32x1xf32>
      tpu.vector_store %arg9[%c0_28, %c0_29], %41 {strides = array<i32>} : memref<32x1xf32, #tpu.memory_space<vmem>>, vector<32x1xf32>,
    } else {
    }
    %c0 = arith.constant 0 : index
    %c0_1 = arith.constant 0 : index
    %3 = vector.load %arg3[%c0, %c0_1] : memref<32x128xf32, #tpu.memory_space<vmem>>, vector<32x128xf32>
    %c0_2 = arith.constant 0 : index
    %c0_3 = arith.constant 0 : index
    %4 = vector.load %arg4[%c0_2, %c0_3] : memref<32x1xi32, #tpu.memory_space<vmem>>, vector<32x1xi32>
    %c128_i32 = arith.constant 128 : i32
    %5 = arith.muli %arg2, %c128_i32 : i32
    %6 = tpu.iota {dimensions = array<i32: 1>} : vector<32x128xi32>
    %7 = vector.broadcast %5 : i32 to vector<32x128xi32>
    %8 = arith.addi %7, %6 : vector<32x128xi32>
    %9 = vector.broadcast %4 : vector<32x1xi32> to vector<32x128xi32>
    %10 = arith.cmpi eq, %8, %9 : vector<32x128xi32>
    %c0_4 = arith.constant 0 : index
    %c0_5 = arith.constant 0 : index
    %11 = vector.load %arg7[%c0_4, %c0_5] : memref<32x1xf32, #tpu.memory_space<vmem>>, vector<32x1xf32>
    %cst = arith.constant dense<0xFF800000> : vector<32xf32>
    %12 = vector.multi_reduction <maximumf>, %3, %cst [1] : vector<32x128xf32> to vector<32xf32>
    %13 = vector.shape_cast %12 : vector<32xf32> to vector<32x1xf32>
    %14 = arith.maximumf %11, %13 : vector<32x1xf32>
    %c0_6 = arith.constant 0 : index
    %c0_7 = arith.constant 0 : index
    %15 = vector.load %arg8[%c0_6, %c0_7] : memref<32x1xf32, #tpu.memory_space<vmem>>, vector<32x1xf32>
    %16 = arith.subf %11, %14 : vector<32x1xf32>
    %17 = math.exp %16 : vector<32x1xf32>
    %18 = arith.mulf %15, %17 : vector<32x1xf32>
    %19 = vector.broadcast %14 : vector<32x1xf32> to vector<32x128xf32>
    %20 = arith.subf %3, %19 : vector<32x128xf32>
    %21 = math.exp %20 : vector<32x128xf32>
    %cst_8 = arith.constant dense<0.000000e+00> : vector<32xf32>
    %22 = vector.multi_reduction <add>, %21, %cst_8 [1] : vector<32x128xf32> to vector<32xf32>
    %23 = vector.shape_cast %22 : vector<32xf32> to vector<32x1xf32>
    %24 = arith.addf %18, %23 : vector<32x1xf32>
    %c0_9 = arith.constant 0 : index
    %c0_10 = arith.constant 0 : index
    %25 = vector.load %arg8[%c0_9, %c0_10] : memref<32x1xf32, #tpu.memory_space<vmem>>, vector<32x1xf32>
    tpu.vector_store %arg8[%c0_9, %c0_10], %24 {strides = array<i32>} : memref<32x1xf32, #tpu.memory_space<vmem>>, vector<32x1xf32>,
    %c0_11 = arith.constant 0 : index
    %c0_12 = arith.constant 0 : index
    %26 = vector.load %arg9[%c0_11, %c0_12] : memref<32x1xf32, #tpu.memory_space<vmem>>, vector<32x1xf32>
    %cst_13 = arith.constant 0.000000e+00 : f32
    %27 = vector.broadcast %cst_13 : f32 to vector<32x128xf32>
    %28 = arith.select %10, %3, %27 : vector<32x128xi1>, vector<32x128xf32>
    %cst_14 = arith.constant dense<0.000000e+00> : vector<32xf32>
    %29 = vector.multi_reduction <add>, %28, %cst_14 [1] : vector<32x128xf32> to vector<32xf32>
    %30 = vector.shape_cast %29 : vector<32xf32> to vector<32x1xf32>
    %31 = arith.addf %26, %30 : vector<32x1xf32>
    %c0_15 = arith.constant 0 : index
    %c0_16 = arith.constant 0 : index
    %32 = vector.load %arg9[%c0_15, %c0_16] : memref<32x1xf32, #tpu.memory_space<vmem>>, vector<32x1xf32>
    tpu.vector_store %arg9[%c0_15, %c0_16], %31 {strides = array<i32>} : memref<32x1xf32, #tpu.memory_space<vmem>>, vector<32x1xf32>,
    %c0_17 = arith.constant 0 : index
    %c0_18 = arith.constant 0 : index
    %33 = vector.load %arg7[%c0_17, %c0_18] : memref<32x1xf32, #tpu.memory_space<vmem>>, vector<32x1xf32>
    tpu.vector_store %arg7[%c0_17, %c0_18], %14 {strides = array<i32>} : memref<32x1xf32, #tpu.memory_space<vmem>>, vector<32x1xf32>,
    %c0_i32_19 = arith.constant 0 : i32
    %34 = arith.cmpi eq, %arg2, %c0_i32_19 : i32
    %35 = arith.extui %34 : i1 to i32
    %c0_i32_20 = arith.constant 0 : i32
    %36 = arith.cmpi ne, %35, %c0_i32_20 : i32
    scf.if %36 {
      %c0_21 = arith.constant 0 : index
      %c0_22 = arith.constant 0 : index
      %37 = vector.load %arg7[%c0_21, %c0_22] : memref<32x1xf32, #tpu.memory_space<vmem>>, vector<32x1xf32>
      %c0_23 = arith.constant 0 : index
      %c0_24 = arith.constant 0 : index
      %38 = vector.load %arg8[%c0_23, %c0_24] : memref<32x1xf32, #tpu.memory_space<vmem>>, vector<32x1xf32>
      %39 = math.log %38 : vector<32x1xf32>
      %40 = arith.addf %37, %39 : vector<32x1xf32>
      %c0_25 = arith.constant 0 : index
      %c0_26 = arith.constant 0 : index
      %41 = vector.load %arg5[%c0_25, %c0_26] : memref<32x1xf32, #tpu.memory_space<vmem>>, vector<32x1xf32>
      %c0_27 = arith.constant 0 : index
      %c0_28 = arith.constant 0 : index
      %42 = vector.load %arg9[%c0_27, %c0_28] : memref<32x1xf32, #tpu.memory_space<vmem>>, vector<32x1xf32>
      %43 = arith.subf %40, %42 : vector<32x1xf32>
      %44 = arith.mulf %41, %43 : vector<32x1xf32>
      %c0_29 = arith.constant 0 : index
      %c0_30 = arith.constant 0 : index
      %45 = vector.load %arg6[%c0_29, %c0_30] : memref<32x1xf32, #tpu.memory_space<vmem>>, vector<32x1xf32>
      tpu.vector_store %arg6[%c0_29, %c0_30], %44 {strides = array<i32>} : memref<32x1xf32, #tpu.memory_space<vmem>>, vector<32x1xf32>,
    } else {
    }
    return
  }
  func.func @transform_0(%arg0: i32, %arg1: i32, %arg2: i32) -> (i32, i32) {
    %c1_i32 = arith.constant 1 : i32
    %0 = arith.muli %arg0, %c1_i32 : i32
    %1 = arith.addi %0, %arg1 : i32
    %c0_i32 = arith.constant 0 : i32
    return %1, %arg2 : i32, i32
  }
  func.func @transform_1(%arg0: i32, %arg1: i32, %arg2: i32) -> (i32, i32) {
    %c1_i32 = arith.constant 1 : i32
    %0 = arith.muli %arg0, %c1_i32 : i32
    %1 = arith.addi %0, %arg1 : i32
    %c0_i32 = arith.constant 0 : i32
    %c0_i32_0 = arith.constant 0 : i32
    return %1, %c0_i32 : i32, i32
  }
  func.func @transform_2(%arg0: i32, %arg1: i32, %arg2: i32) -> (i32, i32) {
    %c1_i32 = arith.constant 1 : i32
    %0 = arith.muli %arg0, %c1_i32 : i32
    %1 = arith.addi %0, %arg1 : i32
    %c0_i32 = arith.constant 0 : i32
    %c0_i32_0 = arith.constant 0 : i32
    return %1, %c0_i32 : i32, i32
  }
  func.func @transform_3(%arg0: i32, %arg1: i32, %arg2: i32) -> (i32, i32) {
    %c1_i32 = arith.constant 1 : i32
    %0 = arith.muli %arg0, %c1_i32 : i32
    %1 = arith.addi %0, %arg1 : i32
    %c0_i32 = arith.constant 0 : i32
    %c0_i32_0 = arith.constant 0 : i32
    return %1, %c0_i32 : i32, i32
  }
}

</mosaic_0001>

<llo_original>
// kernel: tpu_custom_call.1
$region0: #{tpu_custom_call.1}
  #allocation0 [shape = 'u32[]', space=smem, size = 0x4, offset = 0x4, fixed_abs, tag = 'smem constant byte address 0x4 - core index']
  #allocation1 [shape = 'u32[144,128]{1,0:T(1,128)}', space=vmem, size = 0x12000, scoped, tag = 'internal scratch']
  #allocation2 [shape = 'f32[32,1]{1,0:T(8,128)}', space=vmem, size = 0x4000, scoped, tag = 'scratch operand']
  #allocation3 [shape = 'f32[32,1]{1,0:T(8,128)}', space=vmem, size = 0x4000, scoped, tag = 'scratch operand']
  #allocation4 [shape = 'f32[32,1]{1,0:T(8,128)}', space=vmem, size = 0x4000, scoped, tag = 'scratch operand']
  %s0 = inlined_call_operand.vmem [shape: f32[32,128], index: 0, kind: input, shape index: {}]
  %s1 = inlined_call_operand.vmem [shape: s32[32,1], index: 1, kind: input, shape index: {}]
  %s2 = inlined_call_operand.vmem [shape: f32[32,1], index: 2, kind: input, shape index: {}]
  %s3 = inlined_call_operand.vmem [shape: f32[32,1], index: 3, kind: output, shape index: {}]
  %s4 = sld [smem:[#allocation0]]
  $region30: #{tpu_custom_call.1} parent=0
    _
  %s6 = ssub.s32 1, %s4
  %s7 = scalar_select 0, %s6, %s4
  // Predicated region
  $region2: #{tpu_custom_call.1} parent=0 // pred_check
    _
  $region3: #{tpu_custom_call.1} parent=0 // pred_check_branch
    %9 = sbr.rel (0) target = $region5
  $region4: #{tpu_custom_call.1} parent=0 // pred_region
    %s10 = sadd.s32 0, 0
    %s11 = smul.u32 4, %s10
    %p12 = scmp.lt.s32.totalorder %s11, 3
    %s13 = scalar_select %p12, %s11, 3
    %s14 = smul.addr %s13, 8
    %s15 = scalar_lea.vmem %s0, %s14
    %s16 = sadd.s32 0, 0
    %s17 = smul.u32 4, %s16
  $region5: #{tpu_custom_call.1} parent=0 // pred_fallthru
    _
  // Predicated region
  $region6: #{tpu_custom_call.1} parent=0 // pred_check
    _
  $region7: #{tpu_custom_call.1} parent=0 // pred_check_branch
    %19 = sbr.rel (0) target = $region9
  $region8: #{tpu_custom_call.1} parent=0 // pred_region
    %s20 = sadd.s32 0, 0
    %s21 = smul.u32 4, %s20
    %p22 = scmp.lt.s32.totalorder %s21, 3
    %s23 = scalar_select %p22, %s21, 3
    %s24 = smul.addr %s23, 8
    %s25 = scalar_lea.vmem %s1, %s24
    %s26 = sadd.s32 0, 0
    %s27 = smul.u32 4, %s26
  $region9: #{tpu_custom_call.1} parent=0 // pred_fallthru
    _
  // Predicated region
  $region10: #{tpu_custom_call.1} parent=0 // pred_check
    _
  $region11: #{tpu_custom_call.1} parent=0 // pred_check_branch
    %29 = sbr.rel (0) target = $region13
  $region12: #{tpu_custom_call.1} parent=0 // pred_region
    %s30 = sadd.s32 0, 0
    %s31 = smul.u32 4, %s30
    %p32 = scmp.lt.s32.totalorder %s31, 3
    %s33 = scalar_select %p32, %s31, 3
    %s34 = smul.addr %s33, 8
    %s35 = scalar_lea.vmem %s2, %s34
    %s36 = sadd.s32 0, 0
    %s37 = smul.u32 4, %s36
  $region13: #{tpu_custom_call.1} parent=0 // pred_fallthru
    _
  %s38 = sadd.s32 0, 0
  %s39 = smul.u32 4, %s38
  %p40 = scmp.lt.s32.totalorder %s39, 3
  %s41 = scalar_select %p40, %s39, 3
  %s42 = smul.addr %s41, 8
  %s43 = scalar_lea.vmem %s0, %s42
  %s44 = sadd.s32 0, 0
  %s45 = smul.u32 4, %s44
  %p46 = scmp.lt.s32.totalorder %s45, 3
  %s47 = scalar_select %p46, %s45, 3
  %s48 = smul.addr %s47, 8
  %s49 = scalar_lea.vmem %s1, %s48
  %s50 = sadd.s32 0, 0
  %s51 = smul.u32 4, %s50
  %p52 = scmp.lt.s32.totalorder %s51, 3
  %s53 = scalar_select %p52, %s51, 3
  %s54 = smul.addr %s53, 8
  %s55 = scalar_lea.vmem %s2, %s54
  %s56 = sadd.s32 0, 0
  %s57 = smul.u32 4, %s56
  %p58 = scmp.lt.s32.totalorder %s57, 3
  %s59 = scalar_select %p58, %s57, 3
  %s60 = smul.addr %s59, 8
  %s61 = scalar_lea.vmem %s3, %s60
  %s62 = sadd.s32 0, 0
  %s63 = smul.u32 4, %s62
  %p64 = scmp.lt.s32.totalorder %s63, 3
  %s65 = scalar_select %p64, %s63, 3
  %s66 = smul.addr %s65, 8
  %s67 = scalar_lea.vmem %s0, %s66
  %s68 = sadd.s32 0, 0
  %s69 = smul.u32 4, %s68
  %s70 = sadd.s32 0, 0
  %s71 = smul.u32 4, %s70
  %p72 = scmp.lt.s32.totalorder %s71, 3
  %s73 = scalar_select %p72, %s71, 3
  %s74 = smul.addr %s73, 8
  %s75 = scalar_lea.vmem %s1, %s74
  %s76 = sadd.s32 0, 0
  %s77 = smul.u32 4, %s76
  %s78 = sadd.s32 0, 0
  %s79 = smul.u32 4, %s78
  %p80 = scmp.lt.s32.totalorder %s79, 3
  %s81 = scalar_select %p80, %s79, 3
  %s82 = smul.addr %s81, 8
  %s83 = scalar_lea.vmem %s2, %s82
  %s84 = sadd.s32 0, 0
  %s85 = smul.u32 4, %s84
  %s86 = sadd.s32 0, 0
  %s87 = smul.u32 4, %s86
  %p88 = scmp.lt.s32.totalorder %s87, 3
  %s89 = scalar_select %p88, %s87, 3
  %s90 = smul.addr %s89, 8
  %s91 = scalar_lea.vmem %s3, %s90
  %s92 = sadd.s32 0, 0
  %s93 = smul.u32 4, %s92
  %p94 = scmp.eq.s32.totalorder 0, 0
  // Predicated region
  $region14: #{tpu_custom_call.1} parent=0 // pred_check
    %p95 = pneg %p94
  $region15: #{tpu_custom_call.1} parent=0 // pred_check_branch
    %97 = sbr.rel (%p95) target = $region17
  $region16: #{tpu_custom_call.1} parent=0 // pred_region
    %vm98 = vcmask 7168
    %99 = vst.msk [vmem:[#allocation2] sm:$0xff] %vm98, -inf
    %100 = vst.msk [vmem:[#allocation2 + $0x8] sm:$0xff] %vm98, -inf
    %101 = vst.msk [vmem:[#allocation2 + $0x10] sm:$0xff] %vm98, -inf
    %102 = vst.msk [vmem:[#allocation2 + $0x18] sm:$0xff] %vm98, -inf
    %103 = vst.msk [vmem:[#allocation3] sm:$0xff] %vm98, 0.0
    %104 = vst.msk [vmem:[#allocation3 + $0x8] sm:$0xff] %vm98, 0.0
    %105 = vst.msk [vmem:[#allocation3 + $0x10] sm:$0xff] %vm98, 0.0
    %106 = vst.msk [vmem:[#allocation3 + $0x18] sm:$0xff] %vm98, 0.0
    %107 = vst.msk [vmem:[#allocation4] sm:$0xff] %vm98, 0.0
    %108 = vst.msk [vmem:[#allocation4 + $0x8] sm:$0xff] %vm98, 0.0
    %109 = vst.msk [vmem:[#allocation4 + $0x10] sm:$0xff] %vm98, 0.0
    %110 = vst.msk [vmem:[#allocation4 + $0x18] sm:$0xff] %vm98, 0.0
  $region17: #{tpu_custom_call.1} parent=0 // pred_fallthru
    _
  %v111 = vld [vmem:[%s67] sm:$0xff]
  %v112 = vld [vmem:[%s67 + $0x8] sm:$0xff]
  %v113 = vld [vmem:[%s67 + $0x10] sm:$0xff]
  %v114 = vld [vmem:[%s67 + $0x18] sm:$0xff]
  %v115 = vld [vmem:[%s75] sm:$0xff]
  %v116 = vld [vmem:[%s75 + $0x8] sm:$0xff]
  %v117 = vld [vmem:[%s75 + $0x10] sm:$0xff]
  %v118 = vld [vmem:[%s75 + $0x18] sm:$0xff]
  %s119 = smul.u32 0, 128
  %v120 = vlaneseq
  %v121 = vand.u32 %v120, 127
  %v122 = vstv %s119
  %v123 = vadd.s32 %v122, %v121
  %124 = vset.pattern.permute.xlu0 0
  %125 = vperm.xlu0 %124, %v115
  %v126 = vpop.permute.xlu0 %125
  %127 = vset.pattern.permute.xlu0 0
  %128 = vperm.xlu0 %127, %v116
  %v129 = vpop.permute.xlu0 %128
  %130 = vset.pattern.permute.xlu0 0
  %131 = vperm.xlu0 %130, %v117
  %v132 = vpop.permute.xlu0 %131
  %133 = vset.pattern.permute.xlu0 0
  %134 = vperm.xlu0 %133, %v118
  %v135 = vpop.permute.xlu0 %134
  %vm136 = vcmp.eq.s32.totalorder %v123, %v126
  %vm137 = vcmp.eq.s32.totalorder %v123, %v129
  %vm138 = vcmp.eq.s32.totalorder %v123, %v132
  %vm139 = vcmp.eq.s32.totalorder %v123, %v135
  %v140 = vld [vmem:[#allocation2] sm:$0xff]
  %v141 = vld [vmem:[#allocation2 + $0x8] sm:$0xff]
  %v142 = vld [vmem:[#allocation2 + $0x10] sm:$0xff]
  %v143 = vld [vmem:[#allocation2 + $0x18] sm:$0xff]
  %144 = vmax.xlane.f32.xlu0 %v111
  %v145 = vpop.xlane.xlu0 %144
  %146 = vmax.xlane.f32.xlu0 %v112
  %v147 = vpop.xlane.xlu0 %146
  %148 = vmax.xlane.f32.xlu0 %v113
  %v149 = vpop.xlane.xlu0 %148
  %150 = vmax.xlane.f32.xlu0 %v114
  %v151 = vpop.xlane.xlu0 %150
  %v152 = vmax.f32 %v140, %v145
  %v153 = vmax.f32 %v141, %v147
  %v154 = vmax.f32 %v142, %v149
  %v155 = vmax.f32 %v143, %v151
  %v156 = vld [vmem:[#allocation3] sm:$0xff]
  %v157 = vld [vmem:[#allocation3 + $0x8] sm:$0xff]
  %v158 = vld [vmem:[#allocation3 + $0x10] sm:$0xff]
  %v159 = vld [vmem:[#allocation3 + $0x18] sm:$0xff]
  %v160 = vsub.f32 %v140, %v152
  %v161 = vsub.f32 %v141, %v153
  %v162 = vsub.f32 %v142, %v154
  %v163 = vsub.f32 %v143, %v155
  %v164 = vmul.f32 %v160, 1.442695
  %v165 = vpow.pop %v164
  %v166 = vmul.f32 %v161, 1.442695
  %v167 = vpow.pop %v166
  %v168 = vmul.f32 %v162, 1.442695
  %v169 = vpow.pop %v168
  %v170 = vmul.f32 %v163, 1.442695
  %v171 = vpow.pop %v170
  %v172 = vmul.f32 %v156, %v165
  %v173 = vmul.f32 %v157, %v167
  %v174 = vmul.f32 %v158, %v169
  %v175 = vmul.f32 %v159, %v171
  %177 = vset.pattern.permute.xlu0 0
  %178 = vperm.xlu0 %177, %v152
  %v179 = vpop.permute.xlu0 %178
  %182 = vset.pattern.permute.xlu0 0
  %183 = vperm.xlu0 %182, %v153
  %v184 = vpop.permute.xlu0 %183
  %187 = vset.pattern.permute.xlu0 0
  %188 = vperm.xlu0 %187, %v154
  %v189 = vpop.permute.xlu0 %188
  %192 = vset.pattern.permute.xlu0 0
  %193 = vperm.xlu0 %192, %v155
  %v194 = vpop.permute.xlu0 %193
  %v196 = vsub.f32 %v111, %v179
  %v197 = vsub.f32 %v112, %v184
  %v198 = vsub.f32 %v113, %v189
  %v199 = vsub.f32 %v114, %v194
  %v200 = vmul.f32 %v196, 1.442695
  %v201 = vpow.pop %v200
  %v202 = vmul.f32 %v197, 1.442695
  %v203 = vpow.pop %v202
  %v204 = vmul.f32 %v198, 1.442695
  %v205 = vpow.pop %v204
  %v206 = vmul.f32 %v199, 1.442695
  %v207 = vpow.pop %v206
  %208 = vadd.xlane.f32.xlu0 %v201
  %v209 = vpop.xlane.xlu0 %208
  %210 = vadd.xlane.f32.xlu0 %v203
  %v211 = vpop.xlane.xlu0 %210
  %212 = vadd.xlane.f32.xlu0 %v205
  %v213 = vpop.xlane.xlu0 %212
  %214 = vadd.xlane.f32.xlu0 %v207
  %v215 = vpop.xlane.xlu0 %214
  %v216 = vadd.f32 %v172, %v209
  %v217 = vadd.f32 %v173, %v211
  %v218 = vadd.f32 %v174, %v213
  %v219 = vadd.f32 %v175, %v215
  %vm220 = vcmask 7168
  %221 = vst.msk [vmem:[#allocation3] sm:$0xff] %vm220, %v216
  %222 = vst.msk [vmem:[#allocation3 + $0x8] sm:$0xff] %vm220, %v217
  %223 = vst.msk [vmem:[#allocation3 + $0x10] sm:$0xff] %vm220, %v218
  %224 = vst.msk [vmem:[#allocation3 + $0x18] sm:$0xff] %vm220, %v219
  %v225 = vld [vmem:[#allocation4] sm:$0xff]
  %v226 = vld [vmem:[#allocation4 + $0x8] sm:$0xff]
  %v227 = vld [vmem:[#allocation4 + $0x10] sm:$0xff]
  %v228 = vld [vmem:[#allocation4 + $0x18] sm:$0xff]
  %v229 = vsel %vm136, %v111, 0.0
  %v230 = vsel %vm137, %v112, 0.0
  %v231 = vsel %vm138, %v113, 0.0
  %v232 = vsel %vm139, %v114, 0.0
  %233 = vadd.xlane.f32.xlu0 %v229
  %v234 = vpop.xlane.xlu0 %233
  %235 = vadd.xlane.f32.xlu0 %v230
  %v236 = vpop.xlane.xlu0 %235
  %237 = vadd.xlane.f32.xlu0 %v231
  %v238 = vpop.xlane.xlu0 %237
  %239 = vadd.xlane.f32.xlu0 %v232
  %v240 = vpop.xlane.xlu0 %239
  %v241 = vadd.f32 %v225, %v234
  %v242 = vadd.f32 %v226, %v236
  %v243 = vadd.f32 %v227, %v238
  %v244 = vadd.f32 %v228, %v240
  %245 = vst.msk [vmem:[#allocation4] sm:$0xff] %vm220, %v241
  %246 = vst.msk [vmem:[#allocation4 + $0x8] sm:$0xff] %vm220, %v242
  %247 = vst.msk [vmem:[#allocation4 + $0x10] sm:$0xff] %vm220, %v243
  %248 = vst.msk [vmem:[#allocation4 + $0x18] sm:$0xff] %vm220, %v244
  %249 = vst.msk [vmem:[#allocation2] sm:$0xff] %vm220, %v152
  %250 = vst.msk [vmem:[#allocation2 + $0x8] sm:$0xff] %vm220, %v153
  %251 = vst.msk [vmem:[#allocation2 + $0x10] sm:$0xff] %vm220, %v154
  %252 = vst.msk [vmem:[#allocation2 + $0x18] sm:$0xff] %vm220, %v155
  // Predicated region
  $region18: #{tpu_custom_call.1} parent=0 // pred_check
    %p253 = pneg %p94
  $region19: #{tpu_custom_call.1} parent=0 // pred_check_branch
    %255 = sbr.rel (%p253) target = $region21
  $region20: #{tpu_custom_call.1} parent=0 // pred_region
    %v256 = vld [vmem:[#allocation2] sm:$0xff]
    %v257 = vld [vmem:[#allocation2 + $0x8] sm:$0xff]
    %v258 = vld [vmem:[#allocation2 + $0x10] sm:$0xff]
    %v259 = vld [vmem:[#allocation2 + $0x18] sm:$0xff]
    %v260 = vld [vmem:[#allocation3] sm:$0xff]
    %v261 = vld [vmem:[#allocation3 + $0x8] sm:$0xff]
    %v262 = vld [vmem:[#allocation3 + $0x10] sm:$0xff]
    %v263 = vld [vmem:[#allocation3 + $0x18] sm:$0xff]
    %v264 = vlog2.pop %v260
    %v265 = vmul.f32 %v264, 0.6931472
    %v266 = vlog2.pop %v261
    %v267 = vmul.f32 %v266, 0.6931472
    %v268 = vlog2.pop %v262
    %v269 = vmul.f32 %v268, 0.6931472
    %v270 = vlog2.pop %v263
    %v271 = vmul.f32 %v270, 0.6931472
    %v272 = vadd.f32 %v256, %v265
    %v273 = vadd.f32 %v257, %v267
    %v274 = vadd.f32 %v258, %v269
    %v275 = vadd.f32 %v259, %v271
    %v276 = vld [vmem:[%s83] sm:$0xff]
    %v277 = vld [vmem:[%s83 + $0x8] sm:$0xff]
    %v278 = vld [vmem:[%s83 + $0x10] sm:$0xff]
    %v279 = vld [vmem:[%s83 + $0x18] sm:$0xff]
    %v280 = vld [vmem:[#allocation4] sm:$0xff]
    %v281 = vld [vmem:[#allocation4 + $0x8] sm:$0xff]
    %v282 = vld [vmem:[#allocation4 + $0x10] sm:$0xff]
    %v283 = vld [vmem:[#allocation4 + $0x18] sm:$0xff]
    %v284 = vsub.f32 %v272, %v280
    %v285 = vsub.f32 %v273, %v281
    %v286 = vsub.f32 %v274, %v282
    %v287 = vsub.f32 %v275, %v283
    %v288 = vmul.f32 %v276, %v284
    %v289 = vmul.f32 %v277, %v285
    %v290 = vmul.f32 %v278, %v286
    %v291 = vmul.f32 %v279, %v287
    %292 = vst.msk [vmem:[%s91] sm:$0xff] %vm220, %v288
    %293 = vst.msk [vmem:[%s91 + $0x8] sm:$0xff] %vm220, %v289
    %294 = vst.msk [vmem:[%s91 + $0x10] sm:$0xff] %vm220, %v290
    %295 = vst.msk [vmem:[%s91 + $0x18] sm:$0xff] %vm220, %v291
  $region21: #{tpu_custom_call.1} parent=0 // pred_fallthru
    _
  %s296 = sadd.s32 0, 0
  %s297 = smul.u32 4, %s296
  %p298 = scmp.lt.s32.totalorder %s297, 3
  %s299 = scalar_select %p298, %s297, 3
  %s300 = smul.addr %s299, 8
  %s301 = scalar_lea.vmem %s3, %s300
  // Predicated region
  $region22: #{tpu_custom_call.1} parent=0 // pred_check
    _
  $region23: #{tpu_custom_call.1} parent=0 // pred_check_branch
    %303 = sbr.rel (0) target = $region25
  $region24: #{tpu_custom_call.1} parent=0 // pred_region
    %s304 = sadd.s32 0, 0
    %s305 = smul.u32 4, %s304
  $region25: #{tpu_custom_call.1} parent=0 // pred_fallthru
    _
  // Predicated region
  $region26: #{tpu_custom_call.1} parent=0 // pred_check
    _
  $region27: #{tpu_custom_call.1} parent=0 // pred_check_branch
    %307 = sbr.rel (0) target = $region29
  $region28: #{tpu_custom_call.1} parent=0 // pred_region
    %s308 = sadd.s32 0, 0
    %s309 = smul.u32 4, %s308
    %p310 = scmp.lt.s32.totalorder %s309, 3
    %s311 = scalar_select %p310, %s309, 3
    %s312 = smul.addr %s311, 8
    %s313 = scalar_lea.vmem %s3, %s312
  $region29: #{tpu_custom_call.1} parent=0 // pred_fallthru
    _

</llo_original>
